<compile_context>
chip_gen: v5e
topology: v5e:2x2
jax: 0.10.0
libtpu: 0.0.40
codegen_flags: <defaults>
</compile_context>

<pallas_src>
import functools

import jax
import jax.numpy as jnp
from jax.experimental import pallas as pl
from jax.experimental.pallas import tpu as pltpu


def _round_up(n, m):
    return (n + m - 1) // m * m


def _anchor_dist_kernel(x_ref, at_ref, an2_ref, o_ref):
    # x_ref:   (TB, D)        batch tile of embeddings (pipelined)
    # at_ref:  (D, CA_pad)    anchors, transposed (resident, single-buffered)
    # an2_ref: (1, CA_pad)    precomputed ||anchor||^2, f32 (resident)
    # o_ref:   (TB, CA_pad)   distances, f32
    x = x_ref[...]
    xf = x.astype(jnp.float32)
    x_norm2 = jnp.sum(xf * xf, axis=-1, keepdims=True)                 # (TB, 1) VPU
    xa = jnp.dot(x, at_ref[...], preferred_element_type=jnp.float32)   # MXU, f32 acc
    d2 = x_norm2 + an2_ref[...] - 2.0 * xa                             # VPU broadcast
    # TODO(synk): the norm-expansion form cancels when anchors ~= x; switch to a direct
    # (a - x)^2 tile if small-distance relative accuracy ever matters (e.g. backward).
    o_ref[...] = jnp.sqrt(jnp.maximum(d2, 0.0))


def prepare_anchors(anchors, input_dtype=jnp.float32):
    """One-time prep (per anchors-parameter update): transpose, lane-pad, norms.

    Hoisted out of the per-step forward so the O(C*A*D) HBM shuffle is not
    repeated every call.  `input_dtype=jnp.bfloat16` halves anchor DMA bytes
    (norms / accumulator stay f32) if the accuracy loss is acceptable.
    """
    anchors = anchors.astype(jnp.float32)
    C, A, D = anchors.shape
    CA = C * A
    CA_pad = _round_up(CA, 128)
    a_flat = anchors.reshape(CA, D)
    a_t = a_flat.T                                                # (D, CA)
    a_n2 = jnp.sum(a_flat * a_flat, axis=-1)[None, :]             # (1, CA)
    if CA_pad != CA:
        a_t = jnp.pad(a_t, ((0, 0), (0, CA_pad - CA)))
        a_n2 = jnp.pad(a_n2, ((0, 0), (0, CA_pad - CA)))
    return a_t.astype(input_dtype), a_n2.astype(jnp.float32)


@functools.partial(
    jax.jit,
    static_argnames=("n_classes", "n_anchors", "tb_max", "force_kernel"))
def anchors_forward(x, a_t, a_n2, n_classes, n_anchors, *,
                    tb_max=512, force_kernel=False):
    """x: (B, D); a_t: (D, CA_pad); a_n2: (1, CA_pad) -> distances (B, C, A)."""
    B, D = x.shape
    Dt, CA_pad = a_t.shape
    assert Dt == D, (Dt, D)
    C, A = n_classes, n_anchors
    CA = C * A
    assert CA <= CA_pad, (CA, CA_pad)

    x = x.astype(a_t.dtype)  # matches anchors dtype; kernel keeps norms/acc in f32

    # --- Small-problem fast path: wrapper/launch overhead dominates, fused XLA wins.
    if (not force_kernel) and (B * CA * D < (1 << 17)):
        xf = x.astype(jnp.float32)
        d2 = (jnp.sum(xf * xf, axis=-1, keepdims=True) + a_n2
              - 2.0 * jnp.dot(xf, a_t.astype(jnp.float32)))
        out = jnp.sqrt(jnp.maximum(d2, 0.0))
        return out[:, :CA].reshape(B, C, A)

    # --- Batch tiling: multiple of 8 sublanes; aim for >= 2 grid steps so v7x's two
    # TensorCores both get work (harmless on single-TC v5e/v6e).
    tb_cap = _round_up(max(tb_max, 8), 8)
    B8 = _round_up(B, 8)
    TB = min(tb_cap, B8)
    if B8 > 8:
        TB = min(TB, _round_up(pl.cdiv(B8, 2), 8))

    x_bytes = jnp.dtype(x.dtype).itemsize
    a_bytes = jnp.dtype(a_t.dtype).itemsize

    def footprint(tb):
        return (2 * tb * D * x_bytes          # x tiles, double-buffered
                + 2 * tb * CA_pad * 4         # out tiles, double-buffered
                + D * CA_pad * a_bytes        # anchors^T, resident single buffer
                + 8 * CA_pad * 4)             # ||a||^2 (padded to 8 sublanes)

    VMEM_DATA_BUDGET = 48 * 1024 * 1024       # conservative under v7x's 64 MiB physical
    while TB > 8 and footprint(TB) > VMEM_DATA_BUDGET:
        TB = max(8, _round_up(TB // 2, 8))
    # TODO(synk): if the resident anchors slab alone exceeds the budget (very large
    # C*A*D), add a second grid axis over CA_pad instead of shrinking TB further.

    grid_b = pl.cdiv(B, TB)
    B_pad = grid_b * TB
    x_p = x if B_pad == B else jnp.pad(x, ((0, B_pad - B), (0, 0)))

    fp = footprint(TB)
    vmem_limit = int(min(max(fp * 5 // 4, 32 * 1024 * 1024), 56 * 1024 * 1024))

    cost = pl.CostEstimate(
        flops=2 * B_pad * CA_pad * D + 4 * B_pad * CA_pad,
        transcendentals=B_pad * CA_pad,
        bytes_accessed=(B_pad * D * x_bytes + D * CA_pad * a_bytes
                        + CA_pad * 4 + B_pad * CA_pad * 4),
    )

    out = pl.pallas_call(
        _anchor_dist_kernel,
        out_shape=jax.ShapeDtypeStruct((B_pad, CA_pad), jnp.float32),
        grid=(grid_b,),
        in_specs=[
            pl.BlockSpec((TB, D), lambda i: (i, 0)),        # x tile (pipelined)
            pl.BlockSpec((D, CA_pad), lambda i: (0, 0),
                         pipeline_mode=pl.Buffered(1)),     # anchors^T (resident)
            pl.BlockSpec((1, CA_pad), lambda i: (0, 0),
                         pipeline_mode=pl.Buffered(1)),     # ||anchor||^2 (resident)
        ],
        out_specs=pl.BlockSpec((TB, CA_pad), lambda i: (i, 0)),
        compiler_params=pltpu.CompilerParams(
            dimension_semantics=("parallel",),              # megacore / v7x 2-TC sharding
            vmem_limit_bytes=vmem_limit,
        ),
        cost_estimate=cost,
    )(x_p, a_t, a_n2)

    if B_pad != B or CA_pad != CA:
        out = out[:B, :CA]
    return out.reshape(B, C, A)


def anchors_forward_ref(x, anchors):
    # Pure-JAX reference mirroring the PyTorch forward exactly.
    xv = x.reshape(x.shape[0], 1, 1, x.shape[1])          # (B, 1, 1, D)
    a = anchors[None, :, :, :]                             # (1, C, A, D)
    d = jnp.sum((a - xv) ** 2, axis=-1)                    # (B, C, A)
    return jnp.sqrt(d)


if __name__ == "__main__":
    # Small shapes consistent with the module: size_emb=32, n_classes=8, n_anchors=10.
    # B=16 gives a 2-step batch grid (TB=8) so the pipelined kernel path is exercised.
    B, D, C, A = 16, 32, 8, 10

    key = jax.random.PRNGKey(0)
    kx, ka = jax.random.split(key)
    x = jax.random.normal(kx, (B, D), dtype=jnp.float32)
    # Module's __init__ uses zeros; use small random values so distances are
    # non-trivial — still fully deterministic from PRNGKey(0).
    anchors = 0.1 * jax.random.normal(ka, (C, A, D), dtype=jnp.float32)

    # One-time anchor prep (done when the parameter changes, not per forward).
    a_t, a_n2 = prepare_anchors(anchors)

    ref = anchors_forward_ref(x, anchors)

    # Pallas kernel path.
    out = anchors_forward(x, a_t, a_n2, n_classes=C, n_anchors=A, force_kernel=True)
    out = jax.block_until_ready(out)
    assert out.shape == (B, C, A), out.shape
    assert jnp.allclose(out, ref, atol=1e-4, rtol=1e-5), (
        float(jnp.max(jnp.abs(out - ref))))

    # Small-problem fast path (skips pallas_call at tiny sizes).
    out_fast = anchors_forward(x, a_t, a_n2, n_classes=C, n_anchors=A)
    out_fast = jax.block_until_ready(out_fast)
    assert jnp.allclose(out_fast, ref, atol=1e-4, rtol=1e-5), (
        float(jnp.max(jnp.abs(out_fast - ref))))

    print("KERNEL_OK")
</pallas_src>

<mosaic_0001>
module attributes {stable_mosaic.version = 11 : i64} {
  func.func @_anchor_dist_kernel(%arg0: i32, %arg1: memref<8x32xf32, #tpu.memory_space<vmem>>, %arg2: memref<32x128xf32, #tpu.memory_space<vmem>>, %arg3: memref<1x128xf32, #tpu.memory_space<vmem>>, %arg4: memref<8x128xf32, #tpu.memory_space<vmem>>) attributes {dimension_semantics = [#tpu.dimension_semantics<parallel>], iteration_bounds = array<i64: 2>, scalar_prefetch = 0 : i64, scratch_operands = 0 : i64, tpu.core_type = #tpu.core_type<tc>, window_params = [{transform_indices = @transform_0, window_bounds = array<i64: 8, 32>}, {pipeline_mode = #tpu.pipeline_mode<synchronous>, transform_indices = @transform_1, window_bounds = array<i64: 32, 128>}, {pipeline_mode = #tpu.pipeline_mode<synchronous>, transform_indices = @transform_2, window_bounds = array<i64: 1, 128>}, {transform_indices = @transform_3, window_bounds = array<i64: 8, 128>}]} {
    %c0 = arith.constant 0 : index
    %c0_0 = arith.constant 0 : index
    %0 = vector.load %arg1[%c0, %c0_0] : memref<8x32xf32, #tpu.memory_space<vmem>>, vector<8x32xf32>
    %1 = arith.mulf %0, %0 : vector<8x32xf32>
    %cst = arith.constant dense<0.000000e+00> : vector<8xf32>
    %2 = vector.multi_reduction <add>, %1, %cst [1] : vector<8x32xf32> to vector<8xf32>
    %3 = vector.shape_cast %2 : vector<8xf32> to vector<8x1xf32>
    %c0_1 = arith.constant 0 : index
    %c0_2 = arith.constant 0 : index
    %4 = vector.load %arg2[%c0_1, %c0_2] : memref<32x128xf32, #tpu.memory_space<vmem>>, vector<32x128xf32>
    %cst_3 = arith.constant dense<0.000000e+00> : vector<8x128xf32>
    %5 = tpu.matmul %0, %4, %cst_3 {dimension_numbers = #tpu.dot_dimension_numbers<[1], [0], [0], [1], [0, 0, 1, 1], [], []>} : vector<8x32xf32>, vector<32x128xf32>, vector<8x128xf32> -> vector<8x128xf32>
    %c0_4 = arith.constant 0 : index
    %c0_5 = arith.constant 0 : index
    %6 = vector.load %arg3[%c0_4, %c0_5] : memref<1x128xf32, #tpu.memory_space<vmem>>, vector<1x128xf32>
    %7 = vector.broadcast %3 : vector<8x1xf32> to vector<8x128xf32>
    %8 = vector.broadcast %6 : vector<1x128xf32> to vector<8x128xf32>
    %9 = arith.addf %7, %8 : vector<8x128xf32>
    %cst_6 = arith.constant 2.000000e+00 : f32
    %10 = vector.broadcast %cst_6 : f32 to vector<8x128xf32>
    %11 = arith.mulf %10, %5 : vector<8x128xf32>
    %12 = arith.subf %9, %11 : vector<8x128xf32>
    %cst_7 = arith.constant 0.000000e+00 : f32
    %13 = vector.broadcast %cst_7 : f32 to vector<8x128xf32>
    %14 = arith.maximumf %12, %13 : vector<8x128xf32>
    %15 = math.sqrt %14 : vector<8x128xf32>
    %c0_8 = arith.constant 0 : index
    %c0_9 = arith.constant 0 : index
    %16 = vector.load %arg4[%c0_8, %c0_9] : memref<8x128xf32, #tpu.memory_space<vmem>>, vector<8x128xf32>
    tpu.vector_store %arg4[%c0_8, %c0_9], %15 {strides = array<i32>} : memref<8x128xf32, #tpu.memory_space<vmem>>, vector<8x128xf32>,
    return
  }
  func.func @transform_0(%arg0: i32) -> (i32, i32) {
    %c0_i32 = arith.constant 0 : i32
    %c0_i32_0 = arith.constant 0 : i32
    return %arg0, %c0_i32 : i32, i32
  }
  func.func @transform_1(%arg0: i32) -> (i32, i32) {
    %c0_i32 = arith.constant 0 : i32
    %c0_i32_0 = arith.constant 0 : i32
    %c0_i32_1 = arith.constant 0 : i32
    return %c0_i32, %c0_i32_0 : i32, i32
  }
  func.func @transform_2(%arg0: i32) -> (i32, i32) {
    %c0_i32 = arith.constant 0 : i32
    %c0_i32_0 = arith.constant 0 : i32
    %c0_i32_1 = arith.constant 0 : i32
    return %c0_i32, %c0_i32_0 : i32, i32
  }
  func.func @transform_3(%arg0: i32) -> (i32, i32) {
    %c0_i32 = arith.constant 0 : i32
    %c0_i32_0 = arith.constant 0 : i32
    return %arg0, %c0_i32 : i32, i32
  }
}

</mosaic_0001>

<llo_original>
// kernel: anchors_forward.1
$region0: #{anchors_forward.1}
  #allocation0 [shape = 'u32[]', space=smem, size = 0x4, offset = 0x4, fixed_abs, tag = 'smem constant byte address 0x4 - core index']
  #allocation1 [shape = 'u32[72,128]{1,0:T(1,128)}', space=vmem, size = 0x9000, scoped, tag = 'internal scratch']
  %s0 = inlined_call_operand.hbm [shape: f32[16,32], index: 0, kind: input, shape index: {}]
  %s1 = inlined_call_operand.hbm [shape: f32[32,128], index: 1, kind: input, shape index: {}]
  %s2 = inlined_call_operand.vmem [shape: f32[1,128], index: 2, kind: input, shape index: {}]
  %s3 = inlined_call_operand.vmem [shape: f32[16,128], index: 3, kind: output, shape index: {}]
  %s4 = sld [smem:[#allocation0]]
  $region53: #{anchors_forward.1} parent=0
    _
  %s6 = ssub.s32 1, %s4
  %s7 = scalar_select 0, %s6, %s4
  $region1: #{anchors_forward.1} parent=0
    #allocation2 [shape = 'u8[8192]{0}', space=vmem, size = 0x2000, scoped, tag = 'input window, operand 0']
    #allocation3 [shape = 's32[2]{0}', space=sflag, size = 0x8, scoped, tag = 'scoped memory for anchors_forward.1']
    #allocation4 [shape = 'u8[16384]{0}', space=vmem, size = 0x4000, scoped, tag = 'input window, operand 1, single buffered']
    #allocation5 [shape = 's32[1]{0}', space=sflag, size = 0x4, scoped, tag = 'scoped memory for anchors_forward.1']
    %8 = vsyncpa [#allocation3], 0
    %s9 = scalar_lea.sflag [#allocation3], 1
    %10 = vsyncpa %s9, 0
    %11 = vsyncpa [#allocation5], 0
    loop: start=0, step=1, limit=4
    $region2: #{anchors_forward.1} parent=1 // loop_pre_header
      _
    $region3: #{anchors_forward.1} parent=1 // loop_header
      %s13 = sphi 0, %s17
      %p14 = scmp.ge.s32.totalorder %s13, 4
      %s23 = sphi 0, %s25
      %s26 = sphi 0, %s23
      %s27 = sphi 0, %s26
      %s43 = sphi 0, %s27
      %s47 = sphi 0, %s47
      %s49 = sphi 0, %s47
      %s50 = sphi 0, %s49
      %s64 = sphi 0, %s50
      %s68 = sphi 0, %s68
      %s70 = sphi 0, %s68
      %s71 = sphi 0, %s70
      %s85 = sphi 0, %s71
      %s91 = sphi 0, %s93
      %s94 = sphi 0, %s91
      %s95 = sphi 0, %s94
      %s111 = sphi 0, %s95
    $region4: #{anchors_forward.1} parent=1 // loop_header_branch
      %16 = sbr.rel (%p14) target = $region8
    $region5: #{anchors_forward.1} parent=1 // loop_body
      %s18 = ssub.s32 %s13, 1
      %s19 = ssub.s32 %s13, 2
      %s20 = sadd.s32 %s13, 1
      %s21 = ssub.s32 %s13, %s20
      %p22 = scmp.eq.s32.totalorder %s21, 0
      %s24 = sadd.s32 %s23, 1
      %s25 = scalar_select %p22, %s23, %s24
      %p28 = pneg %p22
      %p29 = scmp.eq.s32.totalorder %s13, 1
      %p30 = por %p28, %p29
      %p31 = scmp.ne.s32.totalorder %s23, %s26
      %p32 = scmp.eq.s32.totalorder %s13, 0
      %p33 = por %p31, %p32
      %p34 = scmp.ne.s32.totalorder %s23, %s26
      %p35 = scmp.eq.s32.totalorder %s18, 1
      %p36 = por %p34, %p35
      %p37 = scmp.ne.s32.totalorder %s26, %s27
      %p38 = scmp.eq.s32.totalorder %s18, 0
      %p39 = por %p37, %p38
      %p40 = scmp.ne.s32.totalorder %s26, %s27
      %p41 = scmp.eq.s32.totalorder %s19, 1
      %p42 = por %p40, %p41
      %p44 = scmp.ne.s32.totalorder %s27, %s43
      %p45 = scmp.eq.s32.totalorder %s19, 0
      %p46 = por %p44, %p45
      %s48 = sadd.s32 %s47, 1
      %p51 = scmp.eq.s32.totalorder %s13, 1
      %p52 = scmp.ne.s32.totalorder %s47, %s49
      %p53 = scmp.eq.s32.totalorder %s13, 0
      %p54 = por %p52, %p53
      %p55 = scmp.ne.s32.totalorder %s47, %s49
      %p56 = scmp.eq.s32.totalorder %s18, 1
      %p57 = por %p55, %p56
      %p58 = scmp.ne.s32.totalorder %s49, %s50
      %p59 = scmp.eq.s32.totalorder %s18, 0
      %p60 = por %p58, %p59
      %p61 = scmp.ne.s32.totalorder %s49, %s50
      %p62 = scmp.eq.s32.totalorder %s19, 1
      %p63 = por %p61, %p62
      %p65 = scmp.ne.s32.totalorder %s50, %s64
      %p66 = scmp.eq.s32.totalorder %s19, 0
      %p67 = por %p65, %p66
      %s69 = sadd.s32 %s68, 1
      %p72 = scmp.eq.s32.totalorder %s13, 1
      %p73 = scmp.ne.s32.totalorder %s68, %s70
      %p74 = scmp.eq.s32.totalorder %s13, 0
      %p75 = por %p73, %p74
      %p76 = scmp.ne.s32.totalorder %s68, %s70
      %p77 = scmp.eq.s32.totalorder %s18, 1
      %p78 = por %p76, %p77
      %p79 = scmp.ne.s32.totalorder %s70, %s71
      %p80 = scmp.eq.s32.totalorder %s18, 0
      %p81 = por %p79, %p80
      %p82 = scmp.ne.s32.totalorder %s70, %s71
      %p83 = scmp.eq.s32.totalorder %s19, 1
      %p84 = por %p82, %p83
      %p86 = scmp.ne.s32.totalorder %s71, %s85
      %p87 = scmp.eq.s32.totalorder %s19, 0
      %p88 = por %p86, %p87
      %s89 = ssub.s32 %s13, %s20
      %p90 = scmp.eq.s32.totalorder %s89, 0
      %s92 = sadd.s32 %s91, 1
      %s93 = scalar_select %p90, %s91, %s92
      %p96 = pneg %p90
      %p97 = scmp.eq.s32.totalorder %s13, 1
      %p98 = por %p96, %p97
      %p99 = scmp.ne.s32.totalorder %s91, %s94
      %p100 = scmp.eq.s32.totalorder %s13, 0
      %p101 = por %p99, %p100
      %p102 = scmp.ne.s32.totalorder %s91, %s94
      %p103 = scmp.eq.s32.totalorder %s18, 1
      %p104 = por %p102, %p103
      %p105 = scmp.ne.s32.totalorder %s94, %s95
      %p106 = scmp.eq.s32.totalorder %s18, 0
      %p107 = por %p105, %p106
      %p108 = scmp.ne.s32.totalorder %s94, %s95
      %p109 = scmp.eq.s32.totalorder %s19, 1
      %p110 = por %p108, %p109
      %p112 = scmp.ne.s32.totalorder %s95, %s111
      %p113 = scmp.eq.s32.totalorder %s19, 0
      %p114 = por %p112, %p113
      %p115 = scmp.le.s32.totalorder 1, %s13
      %p116 = scmp.lt.s32.totalorder %s13, 3
      %p117 = pnand %p115, %p116
      %p118 = pneg %p117
      // Predicated region
      $region9: #{anchors_forward.1} parent=5 // pred_check
        _
      $region10: #{anchors_forward.1} parent=5 // pred_check_branch
        %120 = sbr.rel (%p117) target = $region12
      $region11: #{anchors_forward.1} parent=5 // pred_region
        %s121 = ssub.s32 %s13, 1
        // Predicated region
        $region13: #{anchors_forward.1} parent=11 // pred_check
          %p122 = pneg %p60
        $region14: #{anchors_forward.1} parent=11 // pred_check_branch
          %124 = sbr.rel (%p122) target = $region16
        $region15: #{anchors_forward.1} parent=11 // pred_region
          %126 = vsyncadd [#allocation5], 0
          %s127 = sshll.u32 %s1, 4
          %s128 = int_to_ptr.hbm [resolvable:$true] %s127
          %s129 = sshll.u32 [#allocation4], 4
          %s130 = int_to_ptr.vmem [resolvable:$true] %s129
          %135 = dma.hbm_to_vmem [thread:$0]  %s128, 512, %s130, [#allocation5], 128, 128, 8
        $region16: #{anchors_forward.1} parent=11 // pred_fallthru
          _
        // Predicated region
        $region17: #{anchors_forward.1} parent=11 // pred_check
          %p136 = pneg %p81
        $region18: #{anchors_forward.1} parent=11 // pred_check_branch
          %138 = sbr.rel (%p136) target = $region20
        $region19: #{anchors_forward.1} parent=11 // pred_region
          _
        $region20: #{anchors_forward.1} parent=11 // pred_fallthru
          _
      $region12: #{anchors_forward.1} parent=5 // pred_fallthru
        _
      %p139 = scmp.lt.s32.totalorder %s13, 2
      // Predicated region
      $region21: #{anchors_forward.1} parent=5 // pred_check
        %p140 = pneg %p139
      $region22: #{anchors_forward.1} parent=5 // pred_check_branch
        %142 = sbr.rel (%p140) target = $region24
      $region23: #{anchors_forward.1} parent=5 // pred_region
        // Predicated region
        $region25: #{anchors_forward.1} parent=23 // pred_check
          %p143 = pneg %p33
        $region26: #{anchors_forward.1} parent=23 // pred_check_branch
          %145 = sbr.rel (%p143) target = $region28
        $region27: #{anchors_forward.1} parent=23 // pred_region
          %s146 = sand.u32 %s23, 1
          %s147 = scalar_lea.sflag [#allocation3], %s146
          %s148 = sand.u32 %s23, 1
          %s149 = smul.addr %s148, 8
          %s150 = scalar_lea.vmem [#allocation2], %s149
          %152 = vsyncadd %s147, 0
          %s153 = smul.addr %s13, 8
          %s154 = scalar_lea.hbm %s0, %s153
          %s156 = sshll.u32 %s154, 4
          %s157 = int_to_ptr.hbm [resolvable:$true] %s156
          %s158 = sshll.u32 %s150, 4
          %s159 = int_to_ptr.vmem [resolvable:$true] %s158
          %161 = dma.hbm_to_vmem [thread:$0]  %s157, 128, %s159, %s147
        $region28: #{anchors_forward.1} parent=23 // pred_fallthru
          _
      $region24: #{anchors_forward.1} parent=5 // pred_fallthru
        _
      %p162 = scmp.le.s32.totalorder 1, %s13
      %p163 = scmp.lt.s32.totalorder %s13, 3
      %p164 = pnand %p162, %p163
      %p165 = pneg %p164
      // Predicated region
      $region29: #{anchors_forward.1} parent=5 // pred_check
        _
      $region30: #{anchors_forward.1} parent=5 // pred_check_branch
        %167 = sbr.rel (%p164) target = $region32
      $region31: #{anchors_forward.1} parent=5 // pred_region
        %s168 = ssub.s32 %s13, 1
        %s169 = sand.u32 %s26, 1
        %s170 = scalar_lea.sflag [#allocation3], %s169
        %s171 = sand.u32 %s26, 1
        %s172 = smul.addr %s171, 8
        %s173 = scalar_lea.vmem [#allocation2], %s172
        // Predicated region
        $region33: #{anchors_forward.1} parent=31 // pred_check
          %p174 = pneg %p39
        $region34: #{anchors_forward.1} parent=31 // pred_check_branch
          %176 = sbr.rel (%p174) target = $region36
        $region35: #{anchors_forward.1} parent=31 // pred_region
          %178 = dma.done %s170, 128
        $region36: #{anchors_forward.1} parent=31 // pred_fallthru
          _
        // Predicated region
        $region37: #{anchors_forward.1} parent=31 // pred_check
          %p179 = pneg %p60
        $region38: #{anchors_forward.1} parent=31 // pred_check_branch
          %181 = sbr.rel (%p179) target = $region40
        $region39: #{anchors_forward.1} parent=31 // pred_region
          %183 = dma.done [#allocation5], 512
        $region40: #{anchors_forward.1} parent=31 // pred_fallthru
          _
        %s184 = sand.u32 %s26, 1
        %s185 = scalar_lea.sflag [#allocation3], %s184
        %s186 = sand.u32 %s26, 1
        %s187 = smul.addr %s186, 8
        %s188 = scalar_lea.vmem [#allocation2], %s187
        %p189 = pneg %p39
        %p190 = pneg %p36
        %p191 = pneg %p60
        %p192 = pneg %p57
        %p193 = pneg %p81
        %p194 = pneg %p78
        %p195 = pneg %p107
        %p196 = pneg %p104
        %p197 = scmp.lt.s32.totalorder %s18, 1
        %s198 = scalar_select %p197, %s18, 1
        %s199 = smul.addr %s198, 8
        %s200 = scalar_lea.vmem %s3, %s199
        %p201 = scmp.lt.s32.totalorder %s18, 1
        %s202 = scalar_select %p201, %s18, 1
        %s203 = smul.addr %s202, 8
        %s204 = scalar_lea.vmem %s3, %s203
        %v205 = vld [vmem:[%s173] sm:$0xff]
        %v206 = vmul.f32 %v205, %v205
        %vm207 = vcmask 261120
        %v208 = vsel %vm207, %v206, 0.0
        %209 = vadd.xlane.f32.xlu0 %v208
        %v210 = vpop.xlane.xlu0 %209
        %v211 = vld [vmem:[#allocation4] sm:$0xff]
        %v212 = vld [vmem:[#allocation4 + $0x8] sm:$0xff]
        %v213 = vld [vmem:[#allocation4 + $0x10] sm:$0xff]
        %v214 = vld [vmem:[#allocation4 + $0x18] sm:$0xff]
        %v216 = vsel %vm207, %v205, 0
        %218 = vmatpush.msra.mxu0 0.0
        %219 = vmatpush.msra.mxu0 0.0
        %220 = vmatpush.msra.mxu0 0.0
        %221 = vmatpush.msra.mxu0 0.0
        %222 = vmatpush.msra.mxu0 0.0
        %223 = vmatpush.msra.mxu0 0.0
        %224 = vmatpush.msra.mxu0 0.0
        %225 = vmatpush.msra.mxu0 0.0
        %226 = vmatpush.msra.mxu0 0.0
        %227 = vmatpush.msra.mxu0 0.0
        %228 = vmatpush.msra.mxu0 0.0
        %229 = vmatpush.msra.mxu0 0.0
        %230 = vmatpush.msra.mxu0 %v214
        %231 = vmatpush.msra.mxu0 %v213
        %232 = vmatpush.msra.mxu0 %v212
        %233 = vmatpush.msra.mxu0 %v211
        %234 = vmatmul.f32.gmra.mxu0 %v216
        %v235 = vpop.f32.mrf.mxu0
        %v236 = vadd.f32 0.0, %v235
        %237 = vdwg.mxu0
        %v238 = vld [vmem:[%s2] sm:$0x1]
        %v240 = vperm.slane %v238, 0
        %v242 = vadd.f32 %v210, %v240
        %v243 = vmul.f32 %v236, 2.0
        %v244 = vsub.f32 %v242, %v243
        %v245 = vmax.f32 %v244, 0.0
        %v246 = vrsqrt.pop %v245
        %v247 = vmul.f32 %v246, %v245
        %v248 = vmul.f32 %v247, %v246
        %v249 = vmul.f32 0.5, %v248
        %v250 = vsub.f32 1.5, %v249
        %v251 = vmul.f32 %v246, %v250
        %v252 = vmul.f32 %v245, %v251
        %vm253 = vcmp.eq.f32.partialorder %v245, inf
        %v254 = vsel %vm253, %v245, %v252
        %vm255 = vcmp.eq.f32.partialorder %v245, 0.0
        %v256 = vand.u32 %v245, 2147483648
        %v257 = vsel %vm255, %v256, %v254
        %258 = vst [vmem:[%s204] sm:$0xff] %v257
        %p259 = scmp.lt.s32.totalorder %s18, 1
        %s260 = scalar_select %p259, %s18, 1
        %s261 = smul.addr %s260, 8
        %s262 = scalar_lea.vmem %s3, %s261
        // Predicated region
        $region41: #{anchors_forward.1} parent=31 // pred_check
          %p263 = pneg %p104
        $region42: #{anchors_forward.1} parent=31 // pred_check_branch
          %265 = sbr.rel (%p263) target = $region44
        $region43: #{anchors_forward.1} parent=31 // pred_region
          _
        $region44: #{anchors_forward.1} parent=31 // pred_fallthru
          _
      $region32: #{anchors_forward.1} parent=5 // pred_fallthru
        _
      %p266 = scmp.le.s32.totalorder 2, %s13
      // Predicated region
      $region45: #{anchors_forward.1} parent=5 // pred_check
        %p267 = pneg %p266
      $region46: #{anchors_forward.1} parent=5 // pred_check_branch
        %269 = sbr.rel (%p267) target = $region48
      $region47: #{anchors_forward.1} parent=5 // pred_region
        %s270 = ssub.s32 %s13, 2
        // Predicated region
        $region49: #{anchors_forward.1} parent=47 // pred_check
          %p271 = pneg %p110
        $region50: #{anchors_forward.1} parent=47 // pred_check_branch
          %273 = sbr.rel (%p271) target = $region52
        $region51: #{anchors_forward.1} parent=47 // pred_region
          %p274 = scmp.lt.s32.totalorder %s19, 1
          %s275 = scalar_select %p274, %s19, 1
          %s276 = smul.addr %s275, 8
          %s277 = scalar_lea.vmem %s3, %s276
        $region52: #{anchors_forward.1} parent=47 // pred_fallthru
          _
      $region48: #{anchors_forward.1} parent=5 // pred_fallthru
        _
    $region6: #{anchors_forward.1} parent=1 // loop_footer
      %s17 = sadd.s32 1, %s13
    $region7: #{anchors_forward.1} parent=1 // loop_footer_branch
      %12 = sbr.rel target = $region3
    $region8: #{anchors_forward.1} parent=1 // loop_exit
      _
    %278 = vsyncpa [#allocation3], 1
    %s279 = scalar_lea.sflag [#allocation3], 1
    %280 = vsyncpa %s279, 1
    %281 = vsyncpa [#allocation5], 1

</llo_original>
